<compile_context>
chip_gen: v7x
topology: tpu7x:2x2x1
jax: 0.10.0
libtpu: 0.0.40
codegen_flags: <defaults>
</compile_context>

<pallas_src>
import functools

import jax
import jax.numpy as jnp
from jax.experimental import pallas as pl
from jax.experimental.pallas import tpu as pltpu


def _global_conv_kernel(x_to_ref, x_from_ref, conv_w_ref, conv_b_ref,
                        from_w_ref, out_ref, xf_buf, *, scale: float,
                        d_conv: int, left: int):
    # x_to_ref:   (Bb, N, D) f32
    # x_from_ref: (Bb, N, D) bf16        unpadded (pre-cast in wrapper)
    # conv_w_ref: (K*D, D)  bf16         tap-major, transposed conv weight
    # conv_b_ref: (1, D)    f32
    # from_w_ref: (D, D)    bf16         transposed linear weight
    # out_ref:    (Bb, 1, D)             one global row per batch element
    # xf_buf:     (Bb, left + N + left, D) bf16 VMEM scratch (zero halo buffer)
    bb, n, d = x_to_ref.shape
    pad = d_conv // 2
    n_buf = xf_buf.shape[1]

    # ---- Stage x_from into the zero-padded VMEM halo buffer (no HBM pad). ----
    # Interior lands at a sublane-aligned offset -> unmasked stores.  Halos are
    # re-zeroed every step (cheap, and correct regardless of megacore sharding).
    xf_buf[:, :left, :] = jnp.zeros((bb, left, d), xf_buf.dtype)
    xf_buf[:, left + n:, :] = jnp.zeros((bb, n_buf - left - n, d), xf_buf.dtype)
    xf_buf[:, left:left + n, :] = x_from_ref[...]
    xf_p = xf_buf[...]                                          # (Bb, n_buf, D) bf16

    # ---- Conv1d(D, D, K, padding=K//2): one fused MXU matmul over all taps ----
    # win[:, :, t*D:(t+1)*D] = x_from (zero padded), shifted by (t - pad).
    cols = [xf_p[:, left - pad + t: left - pad + t + n, :] for t in range(d_conv)]
    win = jnp.concatenate(cols, axis=2)                         # (Bb, N, K*D) bf16
    win = win.reshape(bb * n, d_conv * d)                       # rows independent
    acc = jnp.dot(win, conv_w_ref[...],
                  preferred_element_type=jnp.float32)           # (Bb*N, D) f32
    acc = acc + conv_b_ref[...]                                 # (1, D) broadcast

    # ---- SiLU (sigmoid on the EUP slot) ----
    cxf = acc * jax.nn.sigmoid(acc)

    # ---- from_w linear (no bias) + scale ----
    logits = jnp.dot(cxf.astype(jnp.bfloat16), from_w_ref[...],
                     preferred_element_type=jnp.float32) * scale
    logits = logits.reshape(bb, n, d)

    # ---- softmax over the sequence axis fused with the weighted sum ----
    # glob = sum_n(x_to * e) / sum_n(e); the reciprocal runs on the EUP slot.
    m = jnp.max(logits, axis=1, keepdims=True)                  # (Bb, 1, D)
    e = jnp.exp(logits - m)                                     # (Bb, N, D)
    num = jnp.sum(x_to_ref[...] * e, axis=1, keepdims=True)     # (Bb, 1, D)
    den = jnp.sum(e, axis=1, keepdims=True)                     # (Bb, 1, D)
    out_ref[...] = (num * pl.reciprocal(den, approx=True)).astype(out_ref.dtype)


def _pick_batch_block(b: int, n: int) -> int:
    """Largest divisor of b keeping Bb*N MXU/VMEM friendly (<= 512 rows)."""
    bb = 1
    for cand in range(1, b + 1):
        if b % cand == 0 and cand * n <= 512:
            bb = cand
    # v7x has 2 TensorCores: keep >= 2 parallel grid steps when halving the
    # block still feeds a full 128-row MXU pass.
    if b // bb == 1 and bb % 2 == 0 and (bb // 2) * n >= 128:
        bb //= 2
    return bb


def global_conv(x_to, x_from, conv_w, conv_b, from_w, *, d_conv: int,
                batch_block: int | None = None):
    """x_to, x_from: (B, N, D) float32.
    conv_w: (D_out, D_in, K) PyTorch Conv1d weight layout.
    conv_b: (D,) Conv1d bias.
    from_w: (D_out, D_in) PyTorch Linear weight layout (no bias).
    Returns (B, N, D): the per-batch global vector broadcast over N.
    """
    b, n, d = x_to.shape
    # PyTorch Conv1d with padding=K//2 only keeps the length for odd K.
    assert d_conv % 2 == 1, "GlobalConv 'same-length' conv requires odd d_conv"
    pad = d_conv // 2
    scale = 1.0 / (d ** 0.5)

    bb = batch_block if batch_block is not None else _pick_batch_block(b, n)
    assert b % bb == 0, "batch_block must divide batch"

    # Sublane-aligned halo so the interior store into the scratch is unmasked.
    left = ((pad + 7) // 8) * 8
    n_buf = left + n + left

    # Glue (plain JAX): re-layout / pre-cast operands once.
    x_from_bf = x_from.astype(jnp.bfloat16)                        # MXU-only input
    conv_w_k = jnp.transpose(conv_w, (2, 1, 0)).reshape(d_conv * d, d)
    conv_w_k = conv_w_k.astype(jnp.bfloat16)                       # (K*D, D)
    conv_b_k = conv_b.reshape(1, d).astype(jnp.float32)            # (1, D)
    from_w_k = jnp.transpose(from_w, (1, 0)).astype(jnp.bfloat16)  # (D, D)

    kernel = functools.partial(_global_conv_kernel, scale=scale,
                               d_conv=d_conv, left=left)

    glob = pl.pallas_call(
        kernel,
        out_shape=jax.ShapeDtypeStruct((b, 1, d), x_to.dtype),
        grid_spec=pltpu.PrefetchScalarGridSpec(
            num_scalar_prefetch=0,
            grid=(b // bb,),
            in_specs=[
                pl.BlockSpec((bb, n, d), lambda i: (i, 0, 0)),        # x_to f32
                pl.BlockSpec((bb, n, d), lambda i: (i, 0, 0)),        # x_from bf16
                pl.BlockSpec((d_conv * d, d), lambda i: (0, 0)),      # conv weight
                pl.BlockSpec((1, d), lambda i: (0, 0)),               # conv bias
                pl.BlockSpec((d, d), lambda i: (0, 0)),               # from_w
            ],
            out_specs=pl.BlockSpec((bb, 1, d), lambda i: (i, 0, 0)),
            scratch_shapes=[pltpu.VMEM((bb, n_buf, d), jnp.bfloat16)],
        ),
        # TODO(synk): for very large N/D, tile the sequence axis (online softmax
        # over N) and set vmem_limit_bytes — v7x has only 64 MiB VMEM.
        compiler_params=pltpu.CompilerParams(
            dimension_semantics=("parallel",)),
    )(x_to, x_from_bf, conv_w_k, conv_b_k, from_w_k)

    # The module repeats the global vector across the sequence; do that N-fold
    # broadcast outside the kernel (consumers can use (B, 1, D) directly).
    return jnp.broadcast_to(glob, (b, n, d))


def global_conv_ref(x_to, x_from, conv_w, conv_b, from_w, *, d_conv: int):
    """Pure-JAX f32 reference mirroring the PyTorch forward."""
    b, n, d = x_to.shape
    pad = d_conv // 2
    scale = 1.0 / (d ** 0.5)
    xf_pad = jnp.pad(x_from, ((0, 0), (pad, pad), (0, 0)))
    # cxf[b, j, o] = bias[o] + sum_{t,i} xf_pad[b, j+t, i] * conv_w[o, i, t]
    cxf = jnp.zeros((b, n, d), jnp.float32) + conv_b[None, None, :]
    for t in range(d_conv):
        cxf = cxf + jnp.einsum("bji,oi->bjo", xf_pad[:, t:t + n, :],
                               conv_w[:, :, t])
    cxf = cxf * jax.nn.sigmoid(cxf)
    logits = jnp.einsum("bnd,od->bno", cxf, from_w) * scale
    p = jax.nn.softmax(logits, axis=-2)
    glob_s = jnp.sum(x_to * p, axis=-2)                              # (B, D)
    return jnp.broadcast_to(glob_s[:, None, :], (b, n, d))


if __name__ == "__main__":
    B, N, D, K = 2, 16, 128, 3

    key = jax.random.PRNGKey(0)
    k1, k2, k3, k4, k5 = jax.random.split(key, 5)
    x_to = jax.random.normal(k1, (B, N, D), jnp.float32)
    x_from = jax.random.normal(k2, (B, N, D), jnp.float32)
    conv_w = jax.random.normal(k3, (D, D, K), jnp.float32) * (1.0 / (D * K) ** 0.5)
    conv_b = jax.random.normal(k4, (D,), jnp.float32) * 0.1
    from_w = jax.random.normal(k5, (D, D), jnp.float32) * (1.0 / D ** 0.5)

    out = global_conv(x_to, x_from, conv_w, conv_b, from_w, d_conv=K)
    out = jax.block_until_ready(out)

    ref = global_conv_ref(x_to, x_from, conv_w, conv_b, from_w, d_conv=K)
    assert out.shape == (B, N, D)
    # bf16 matmul operands + approx reciprocal -> loosened tolerance vs f32 ref.
    assert jnp.allclose(out, ref, atol=2e-2, rtol=2e-2), \
        f"max abs err {jnp.max(jnp.abs(out - ref))}"

    print("KERNEL_OK")
</pallas_src>

<mosaic_0001>
module attributes {stable_mosaic.version = 11 : i64} {
  func.func @_global_conv_kernel(%arg0: i32, %arg1: memref<2x16x128xf32, #tpu.memory_space<vmem>>, %arg2: memref<2x16x128xbf16, #tpu.memory_space<vmem>>, %arg3: memref<384x128xbf16, #tpu.memory_space<vmem>>, %arg4: memref<1x128xf32, #tpu.memory_space<vmem>>, %arg5: memref<128x128xbf16, #tpu.memory_space<vmem>>, %arg6: memref<2x1x128xf32, #tpu.memory_space<vmem>>, %arg7: memref<2x32x128xbf16, #tpu.memory_space<vmem>>) attributes {dimension_semantics = [#tpu.dimension_semantics<parallel>], iteration_bounds = array<i64: 1>, scalar_prefetch = 0 : i64, scratch_operands = 1 : i64, tpu.core_type = #tpu.core_type<tc>, window_params = [{transform_indices = @transform_0, window_bounds = array<i64: 2, 16, 128>}, {transform_indices = @transform_1, window_bounds = array<i64: 2, 16, 128>}, {pipeline_mode = #tpu.pipeline_mode<synchronous>, transform_indices = @transform_2, window_bounds = array<i64: 384, 128>}, {pipeline_mode = #tpu.pipeline_mode<synchronous>, transform_indices = @transform_3, window_bounds = array<i64: 1, 128>}, {pipeline_mode = #tpu.pipeline_mode<synchronous>, transform_indices = @transform_4, window_bounds = array<i64: 128, 128>}, {transform_indices = @transform_5, window_bounds = array<i64: 2, 1, 128>}]} {
    %cst = arith.constant 0.000000e+00 : bf16
    %0 = vector.broadcast %cst : bf16 to vector<2x8x128xbf16>
    %c0 = arith.constant 0 : index
    %c0_0 = arith.constant 0 : index
    %c0_1 = arith.constant 0 : index
    %1 = vector.load %arg7[%c0, %c0_0, %c0_1] : memref<2x32x128xbf16, #tpu.memory_space<vmem>>, vector<2x8x128xbf16>
    tpu.vector_store %arg7[%c0, %c0_0, %c0_1], %0 {strides = array<i32>} : memref<2x32x128xbf16, #tpu.memory_space<vmem>>, vector<2x8x128xbf16>,
    %cst_2 = arith.constant 0.000000e+00 : bf16
    %2 = vector.broadcast %cst_2 : bf16 to vector<2x8x128xbf16>
    %c0_3 = arith.constant 0 : index
    %c24 = arith.constant 24 : index
    %c0_4 = arith.constant 0 : index
    %3 = vector.load %arg7[%c0_3, %c24, %c0_4] : memref<2x32x128xbf16, #tpu.memory_space<vmem>>, vector<2x8x128xbf16>
    tpu.vector_store %arg7[%c0_3, %c24, %c0_4], %2 {strides = array<i32>} : memref<2x32x128xbf16, #tpu.memory_space<vmem>>, vector<2x8x128xbf16>,
    %c0_5 = arith.constant 0 : index
    %c0_6 = arith.constant 0 : index
    %c0_7 = arith.constant 0 : index
    %4 = vector.load %arg2[%c0_5, %c0_6, %c0_7] : memref<2x16x128xbf16, #tpu.memory_space<vmem>>, vector<2x16x128xbf16>
    %c0_8 = arith.constant 0 : index
    %c8 = arith.constant 8 : index
    %c0_9 = arith.constant 0 : index
    %5 = vector.load %arg7[%c0_8, %c8, %c0_9] : memref<2x32x128xbf16, #tpu.memory_space<vmem>>, vector<2x16x128xbf16>
    tpu.vector_store %arg7[%c0_8, %c8, %c0_9], %4 {strides = array<i32>} : memref<2x32x128xbf16, #tpu.memory_space<vmem>>, vector<2x16x128xbf16>,
    %c0_10 = arith.constant 0 : index
    %c0_11 = arith.constant 0 : index
    %c0_12 = arith.constant 0 : index
    %6 = vector.load %arg7[%c0_10, %c0_11, %c0_12] : memref<2x32x128xbf16, #tpu.memory_space<vmem>>, vector<2x32x128xbf16>
    %7 = vector.extract_strided_slice %6 {offsets = [0, 7, 0], sizes = [2, 16, 128], strides = [1, 1, 1]} : vector<2x32x128xbf16> to vector<2x16x128xbf16>
    %8 = vector.extract_strided_slice %6 {offsets = [0, 8, 0], sizes = [2, 16, 128], strides = [1, 1, 1]} : vector<2x32x128xbf16> to vector<2x16x128xbf16>
    %9 = vector.extract_strided_slice %6 {offsets = [0, 9, 0], sizes = [2, 16, 128], strides = [1, 1, 1]} : vector<2x32x128xbf16> to vector<2x16x128xbf16>
    %10 = tpu.concatenate %7, %8, %9 in 2 : vector<2x16x128xbf16>, vector<2x16x128xbf16>, vector<2x16x128xbf16> -> vector<2x16x384xbf16>
    %11 = vector.shape_cast %10 : vector<2x16x384xbf16> to vector<32x384xbf16>
    %c0_13 = arith.constant 0 : index
    %c0_14 = arith.constant 0 : index
    %12 = vector.load %arg3[%c0_13, %c0_14] : memref<384x128xbf16, #tpu.memory_space<vmem>>, vector<384x128xbf16>
    %cst_15 = arith.constant dense<0.000000e+00> : vector<32x128xf32>
    %13 = tpu.matmul %11, %12, %cst_15 {dimension_numbers = #tpu.dot_dimension_numbers<[1], [0], [0], [1], [0, 0, 1, 1], [], []>} : vector<32x384xbf16>, vector<384x128xbf16>, vector<32x128xf32> -> vector<32x128xf32>
    %c0_16 = arith.constant 0 : index
    %c0_17 = arith.constant 0 : index
    %14 = vector.load %arg4[%c0_16, %c0_17] : memref<1x128xf32, #tpu.memory_space<vmem>>, vector<1x128xf32>
    %15 = vector.broadcast %14 : vector<1x128xf32> to vector<32x128xf32>
    %16 = arith.addf %13, %15 : vector<32x128xf32>
    %17 = arith.negf %16 : vector<32x128xf32>
    %18 = math.exp %17 : vector<32x128xf32>
    %cst_18 = arith.constant 1.000000e+00 : f32
    %19 = vector.broadcast %cst_18 : f32 to vector<32x128xf32>
    %20 = arith.addf %19, %18 : vector<32x128xf32>
    %21 = arith.divf %19, %20 : vector<32x128xf32>
    %22 = arith.mulf %16, %21 : vector<32x128xf32>
    %23 = arith.truncf %22 : vector<32x128xf32> to vector<32x128xbf16>
    %c0_19 = arith.constant 0 : index
    %c0_20 = arith.constant 0 : index
    %24 = vector.load %arg5[%c0_19, %c0_20] : memref<128x128xbf16, #tpu.memory_space<vmem>>, vector<128x128xbf16>
    %cst_21 = arith.constant dense<0.000000e+00> : vector<32x128xf32>
    %25 = tpu.matmul %23, %24, %cst_21 {dimension_numbers = #tpu.dot_dimension_numbers<[1], [0], [0], [1], [0, 0, 1, 1], [], []>} : vector<32x128xbf16>, vector<128x128xbf16>, vector<32x128xf32> -> vector<32x128xf32>
    %cst_22 = arith.constant 0.0883883461 : f32
    %26 = vector.broadcast %cst_22 : f32 to vector<32x128xf32>
    %27 = arith.mulf %25, %26 : vector<32x128xf32>
    %28 = vector.shape_cast %27 : vector<32x128xf32> to vector<2x16x128xf32>
    %cst_23 = arith.constant dense<0xFF800000> : vector<2x128xf32>
    %29 = vector.multi_reduction <maximumf>, %28, %cst_23 [1] : vector<2x16x128xf32> to vector<2x128xf32>
    %30 = vector.shape_cast %29 : vector<2x128xf32> to vector<2x1x128xf32>
    %31 = vector.broadcast %30 : vector<2x1x128xf32> to vector<2x16x128xf32>
    %32 = arith.subf %28, %31 : vector<2x16x128xf32>
    %33 = math.exp %32 : vector<2x16x128xf32>
    %c0_24 = arith.constant 0 : index
    %c0_25 = arith.constant 0 : index
    %c0_26 = arith.constant 0 : index
    %34 = vector.load %arg1[%c0_24, %c0_25, %c0_26] : memref<2x16x128xf32, #tpu.memory_space<vmem>>, vector<2x16x128xf32>
    %35 = arith.mulf %34, %33 : vector<2x16x128xf32>
    %cst_27 = arith.constant dense<0.000000e+00> : vector<2x128xf32>
    %36 = vector.multi_reduction <add>, %35, %cst_27 [1] : vector<2x16x128xf32> to vector<2x128xf32>
    %37 = vector.shape_cast %36 : vector<2x128xf32> to vector<2x1x128xf32>
    %cst_28 = arith.constant dense<0.000000e+00> : vector<2x128xf32>
    %38 = vector.multi_reduction <add>, %33, %cst_28 [1] : vector<2x16x128xf32> to vector<2x128xf32>
    %39 = vector.shape_cast %38 : vector<2x128xf32> to vector<2x1x128xf32>
    %40 = tpu.reciprocal %39 {approx = true} : vector<2x1x128xf32> -> vector<2x1x128xf32>
    %41 = arith.mulf %37, %40 : vector<2x1x128xf32>
    %c0_29 = arith.constant 0 : index
    %c0_30 = arith.constant 0 : index
    %c0_31 = arith.constant 0 : index
    %42 = vector.load %arg6[%c0_29, %c0_30, %c0_31] : memref<2x1x128xf32, #tpu.memory_space<vmem>>, vector<2x1x128xf32>
    tpu.vector_store %arg6[%c0_29, %c0_30, %c0_31], %41 {strides = array<i32>} : memref<2x1x128xf32, #tpu.memory_space<vmem>>, vector<2x1x128xf32>,
    return
  }
  func.func @transform_0(%arg0: i32) -> (i32, i32, i32) {
    %c0_i32 = arith.constant 0 : i32
    %c0_i32_0 = arith.constant 0 : i32
    %c0_i32_1 = arith.constant 0 : i32
    return %arg0, %c0_i32, %c0_i32_0 : i32, i32, i32
  }
  func.func @transform_1(%arg0: i32) -> (i32, i32, i32) {
    %c0_i32 = arith.constant 0 : i32
    %c0_i32_0 = arith.constant 0 : i32
    %c0_i32_1 = arith.constant 0 : i32
    return %arg0, %c0_i32, %c0_i32_0 : i32, i32, i32
  }
  func.func @transform_2(%arg0: i32) -> (i32, i32) {
    %c0_i32 = arith.constant 0 : i32
    %c0_i32_0 = arith.constant 0 : i32
    %c0_i32_1 = arith.constant 0 : i32
    return %c0_i32, %c0_i32_0 : i32, i32
  }
  func.func @transform_3(%arg0: i32) -> (i32, i32) {
    %c0_i32 = arith.constant 0 : i32
    %c0_i32_0 = arith.constant 0 : i32
    %c0_i32_1 = arith.constant 0 : i32
    return %c0_i32, %c0_i32_0 : i32, i32
  }
  func.func @transform_4(%arg0: i32) -> (i32, i32) {
    %c0_i32 = arith.constant 0 : i32
    %c0_i32_0 = arith.constant 0 : i32
    %c0_i32_1 = arith.constant 0 : i32
    return %c0_i32, %c0_i32_0 : i32, i32
  }
  func.func @transform_5(%arg0: i32) -> (i32, i32, i32) {
    %c0_i32 = arith.constant 0 : i32
    %c0_i32_0 = arith.constant 0 : i32
    %c0_i32_1 = arith.constant 0 : i32
    return %arg0, %c0_i32, %c0_i32_0 : i32, i32, i32
  }
}

</mosaic_0001>

<llo_original>
// kernel: tpu_custom_call.1
$region0: #{tpu_custom_call.1}
  #allocation0 [shape = 'u32[]', space=smem, size = 0x4, offset = 0x4, fixed_abs, tag = 'smem constant byte address 0x4 - core index']
  #allocation1 [shape = 'u32[144,128]{1,0:T(1,128)}', space=vmem, size = 0x12000, scoped, tag = 'internal scratch']
  #allocation2 [shape = 'bf16[2,32,128]{2,1,0:T(16,128)(2,1)}', space=vmem, size = 0x4000, scoped, tag = 'scratch operand']
  %s0 = inlined_call_operand.hbm [shape: f32[2,16,128], index: 0, kind: input, shape index: {}]
  %s1 = inlined_call_operand.hbm [shape: bf16[2,16,128], index: 1, kind: input, shape index: {}]
  %s2 = inlined_call_operand.hbm [shape: bf16[384,128], index: 2, kind: input, shape index: {}]
  %s3 = inlined_call_operand.vmem [shape: f32[1,128], index: 3, kind: input, shape index: {}]
  %s4 = inlined_call_operand.hbm [shape: bf16[128,128], index: 4, kind: input, shape index: {}]
  %s5 = inlined_call_operand.hbm [shape: f32[2,1,128], index: 5, kind: output, shape index: {}]
  %s6 = sld [smem:[#allocation0]]
  $region46: #{tpu_custom_call.1} parent=0
    _
  %s8 = ssub.s32 1, %s6
  %s9 = scalar_select 0, %s8, %s6
  $region1: #{tpu_custom_call.1} parent=0
    #allocation3 [shape = 'u8[16384]{0}', space=vmem, size = 0x4000, scoped, tag = 'input window, operand 0, single buffered']
    #allocation4 [shape = 's32[1]{0}', space=sflag, size = 0x4, scoped, tag = 'scoped memory for tpu_custom_call.1']
    #allocation5 [shape = 's32[1]{0}', space=sflag, size = 0x4, scoped, tag = 'scoped memory for tpu_custom_call.1']
    #allocation6 [shape = 'u8[8192]{0}', space=vmem, size = 0x2000, scoped, tag = 'input window, operand 1, single buffered']
    #allocation7 [shape = 's32[1]{0}', space=sflag, size = 0x4, scoped, tag = 'scoped memory for tpu_custom_call.1']
    #allocation8 [shape = 'u8[98304]{0}', space=vmem, size = 0x18000, scoped, tag = 'input window, operand 2, single buffered']
    #allocation9 [shape = 'u8[32768]{0}', space=vmem, size = 0x8000, scoped, tag = 'input window, operand 4, single buffered']
    #allocation10 [shape = 's32[1]{0}', space=sflag, size = 0x4, scoped, tag = 'scoped memory for tpu_custom_call.1']
    #allocation11 [shape = 'u8[1024]{0}', space=vmem, size = 0x400, scoped, tag = 'output window, operand 0, single buffered']
    %10 = vsyncpa [#allocation4], 0
    %11 = vsyncpa [#allocation7], 0
    %12 = vsyncpa [#allocation10], 0
    %13 = vsyncpa [#allocation5], 0
    // Predicated region
    $region2: #{tpu_custom_call.1} parent=1 // pred_check
      _
    $region3: #{tpu_custom_call.1} parent=1 // pred_check_branch
      %15 = sbr.rel (0) target = $region5
    $region4: #{tpu_custom_call.1} parent=1 // pred_region
      %s17 = ssub.s32 512, 512
      %18 = vsyncadd [#allocation4], %s17
      %s19 = sshll.u32 [#allocation3], 4
      %s20 = int_to_ptr.vmem [resolvable:$true] %s19
      %25 = dma.hbm_to_vmem [thread:$0]  %s0, 512, %s20, [#allocation4], 128, 128, 8
    $region5: #{tpu_custom_call.1} parent=1 // pred_fallthru
      _
    // Predicated region
    $region6: #{tpu_custom_call.1} parent=1 // pred_check
      _
    $region7: #{tpu_custom_call.1} parent=1 // pred_check_branch
      %27 = sbr.rel (0) target = $region9
    $region8: #{tpu_custom_call.1} parent=1 // pred_region
      %s29 = ssub.s32 256, 256
      %30 = vsyncadd [#allocation7], %s29
      %s31 = sshll.u32 [#allocation6], 4
      %s32 = int_to_ptr.vmem [resolvable:$true] %s31
      %37 = dma.hbm_to_vmem [thread:$0]  %s1, 256, %s32, [#allocation7], 64, 64, 4
    $region9: #{tpu_custom_call.1} parent=1 // pred_fallthru
      _
    // Predicated region
    $region10: #{tpu_custom_call.1} parent=1 // pred_check
      _
    $region11: #{tpu_custom_call.1} parent=1 // pred_check_branch
      %39 = sbr.rel (0) target = $region13
    $region12: #{tpu_custom_call.1} parent=1 // pred_region
      %s41 = ssub.s32 3072, 3072
      %42 = vsyncadd [#allocation7], %s41
      %s43 = sshll.u32 [#allocation8], 4
      %s44 = int_to_ptr.vmem [resolvable:$true] %s43
      %49 = dma.hbm_to_vmem [thread:$0]  %s2, 3072, %s44, [#allocation7], 64, 64, 4
    $region13: #{tpu_custom_call.1} parent=1 // pred_fallthru
      _
    // Predicated region
    $region14: #{tpu_custom_call.1} parent=1 // pred_check
      _
    $region15: #{tpu_custom_call.1} parent=1 // pred_check_branch
      %51 = sbr.rel (0) target = $region17
    $region16: #{tpu_custom_call.1} parent=1 // pred_region
      _
    $region17: #{tpu_custom_call.1} parent=1 // pred_fallthru
      _
    // Predicated region
    $region18: #{tpu_custom_call.1} parent=1 // pred_check
      _
    $region19: #{tpu_custom_call.1} parent=1 // pred_check_branch
      %53 = sbr.rel (0) target = $region21
    $region20: #{tpu_custom_call.1} parent=1 // pred_region
      %s55 = ssub.s32 1024, 1024
      %56 = vsyncadd [#allocation10], %s55
      %s57 = sshll.u32 [#allocation9], 4
      %s58 = int_to_ptr.vmem [resolvable:$true] %s57
      %63 = dma.hbm_to_vmem [thread:$0]  %s4, 1024, %s58, [#allocation10], 64, 64, 4
    $region21: #{tpu_custom_call.1} parent=1 // pred_fallthru
      _
    // Predicated region
    $region22: #{tpu_custom_call.1} parent=1 // pred_check
      _
    $region23: #{tpu_custom_call.1} parent=1 // pred_check_branch
      %65 = sbr.rel (0) target = $region25
    $region24: #{tpu_custom_call.1} parent=1 // pred_region
      %66 = dma.done [#allocation4], 512
    $region25: #{tpu_custom_call.1} parent=1 // pred_fallthru
      _
    // Predicated region
    $region26: #{tpu_custom_call.1} parent=1 // pred_check
      _
    $region27: #{tpu_custom_call.1} parent=1 // pred_check_branch
      %68 = sbr.rel (0) target = $region29
    $region28: #{tpu_custom_call.1} parent=1 // pred_region
      %69 = dma.done [#allocation7], 256
    $region29: #{tpu_custom_call.1} parent=1 // pred_fallthru
      _
    // Predicated region
    $region30: #{tpu_custom_call.1} parent=1 // pred_check
      _
    $region31: #{tpu_custom_call.1} parent=1 // pred_check_branch
      %71 = sbr.rel (0) target = $region33
    $region32: #{tpu_custom_call.1} parent=1 // pred_region
      %72 = dma.done [#allocation7], 3072
    $region33: #{tpu_custom_call.1} parent=1 // pred_fallthru
      _
    // Predicated region
    $region34: #{tpu_custom_call.1} parent=1 // pred_check
      _
    $region35: #{tpu_custom_call.1} parent=1 // pred_check_branch
      %74 = sbr.rel (0) target = $region37
    $region36: #{tpu_custom_call.1} parent=1 // pred_region
      %75 = dma.done [#allocation10], 1024
    $region37: #{tpu_custom_call.1} parent=1 // pred_fallthru
      _
    %77 = vst [vmem:[#allocation2] sm:$0xf] 0
    %78 = vst [vmem:[#allocation2 + $0x10] sm:$0xf] 0
    %79 = vst [vmem:[#allocation2 + $0x8] sm:$0xf0] 0
    %80 = vst [vmem:[#allocation2 + $0x18] sm:$0xf0] 0
    %v81 = vld [vmem:[#allocation6] sm:$0xf]
    %v82 = vld [vmem:[#allocation6 + $0x4] sm:$0xf]
    %v83 = vld [vmem:[#allocation6 + $0x8] sm:$0xf]
    %v84 = vld [vmem:[#allocation6 + $0xc] sm:$0xf]
    %v89 = vunpack.c.l.b16 %v81
    %v90 = vunpack.c.l.b16 %v82
    %v91 = vunpack.c.l.b16 %v83
    %v92 = vunpack.c.l.b16 %v84
    %v93 = vpack.c.b16 %v89, %v89
    %v94 = vpack.c.b16 %v90, %v90
    %v95 = vpack.c.b16 %v91, %v91
    %v96 = vpack.c.b16 %v92, %v92
    %101 = vst [vmem:[#allocation2] sm:$0xf0] %v93
    %102 = vst [vmem:[#allocation2 + $0x8] sm:$0xf] %v94
    %103 = vst [vmem:[#allocation2 + $0x10] sm:$0xf0] %v95
    %104 = vst [vmem:[#allocation2 + $0x18] sm:$0xf] %v96
    %v105 = vld [vmem:[#allocation2] sm:$0xff]
    %v106 = vld [vmem:[#allocation2 + $0x8] sm:$0xff]
    %v107 = vld [vmem:[#allocation2 + $0x10] sm:$0xff]
    %v108 = vld [vmem:[#allocation2 + $0x18] sm:$0xff]
    %vm109 = vsmask.f32 7424
    %v111 = vshrl.u32 %v105, 16
    %v113 = vshll.u32 %v105, 16
    %v115 = vrot.slane %v113, 1
    %v116 = vor.u32 %v111, %v115
    %v118 = vshll.u32 %v106, 16
    %v120 = vrot.slane %v118, 1
    %v121 = vsel %vm109, %v116, %v120
    %v122 = vshrl.u32 %v106, 16
    %v124 = vor.u32 %v122, %v120
    %v126 = vshrl.u32 %v107, 16
    %v128 = vshll.u32 %v107, 16
    %v130 = vrot.slane %v128, 1
    %v131 = vor.u32 %v126, %v130
    %v133 = vshll.u32 %v108, 16
    %v135 = vrot.slane %v133, 1
    %v136 = vsel %vm109, %v131, %v135
    %v137 = vshrl.u32 %v108, 16
    %v139 = vor.u32 %v137, %v135
    %vm144 = vcmask 1046528
    %v145 = vrot.slane %v105, 1
    %v146 = vrot.slane %v106, 1
    %v147 = vsel %vm144, %v145, %v146
    %v148 = vrot.slane %v107, 1
    %v149 = vrot.slane %v108, 1
    %v150 = vsel %vm144, %v148, %v149
    %vm151 = vsmask.f32 4352
    %v152 = vrot.slane %v111, 3
    %v153 = vrot.slane %v113, 4
    %v154 = vor.u32 %v152, %v153
    %v155 = vrot.slane %v122, 3
    %v156 = vrot.slane %v118, 4
    %v157 = vor.u32 %v155, %v156
    %v158 = vsel %vm151, %v154, %v157
    %v160 = vshrl.u32 %v121, 16
    %v162 = vrot.slane %v160, 3
    %v163 = vshll.u32 %v121, 16
    %v165 = vrot.slane %v163, 4
    %v166 = vor.u32 %v162, %v165
    %v168 = vshrl.u32 %v124, 16
    %v170 = vrot.slane %v168, 3
    %v171 = vshll.u32 %v124, 16
    %v173 = vrot.slane %v171, 4
    %v174 = vor.u32 %v170, %v173
    %v175 = vsel %vm151, %v166, %v174
    %v177 = vshrl.u32 %v147, 16
    %v179 = vrot.slane %v177, 3
    %v180 = vshll.u32 %v147, 16
    %v182 = vrot.slane %v180, 4
    %v183 = vor.u32 %v179, %v182
    %v185 = vshrl.u32 %v146, 16
    %v187 = vrot.slane %v185, 3
    %v188 = vshll.u32 %v146, 16
    %v190 = vrot.slane %v188, 4
    %v191 = vor.u32 %v187, %v190
    %v192 = vsel %vm151, %v183, %v191
    %v193 = vrot.slane %v126, 3
    %v194 = vrot.slane %v128, 4
    %v195 = vor.u32 %v193, %v194
    %v196 = vrot.slane %v137, 3
    %v197 = vrot.slane %v133, 4
    %v198 = vor.u32 %v196, %v197
    %v199 = vsel %vm151, %v195, %v198
    %v201 = vshrl.u32 %v136, 16
    %v203 = vrot.slane %v201, 3
    %v204 = vshll.u32 %v136, 16
    %v206 = vrot.slane %v204, 4
    %v207 = vor.u32 %v203, %v206
    %v209 = vshrl.u32 %v139, 16
    %v211 = vrot.slane %v209, 3
    %v212 = vshll.u32 %v139, 16
    %v214 = vrot.slane %v212, 4
    %v215 = vor.u32 %v211, %v214
    %v216 = vsel %vm151, %v207, %v215
    %v218 = vshrl.u32 %v150, 16
    %v220 = vrot.slane %v218, 3
    %v221 = vshll.u32 %v150, 16
    %v223 = vrot.slane %v221, 4
    %v224 = vor.u32 %v220, %v223
    %v226 = vshrl.u32 %v149, 16
    %v228 = vrot.slane %v226, 3
    %v229 = vshll.u32 %v149, 16
    %v231 = vrot.slane %v229, 4
    %v232 = vor.u32 %v228, %v231
    %v233 = vsel %vm151, %v224, %v232
    %v240 = vld [vmem:[#allocation8] sm:$0xf]
    %v241 = vld [vmem:[#allocation8 + $0x4] sm:$0xf]
    %v242 = vld [vmem:[#allocation8 + $0x8] sm:$0xf]
    %v243 = vld [vmem:[#allocation8 + $0xc] sm:$0xf]
    %v244 = vld [vmem:[#allocation8 + $0x10] sm:$0xf]
    %v245 = vld [vmem:[#allocation8 + $0x14] sm:$0xf]
    %v246 = vld [vmem:[#allocation8 + $0x18] sm:$0xf]
    %v247 = vld [vmem:[#allocation8 + $0x1c] sm:$0xf]
    %v248 = vld [vmem:[#allocation8 + $0x20] sm:$0xf]
    %v249 = vld [vmem:[#allocation8 + $0x24] sm:$0xf]
    %v250 = vld [vmem:[#allocation8 + $0x28] sm:$0xf]
    %v251 = vld [vmem:[#allocation8 + $0x2c] sm:$0xf]
    %v252 = vld [vmem:[#allocation8 + $0x30] sm:$0xf]
    %v253 = vld [vmem:[#allocation8 + $0x34] sm:$0xf]
    %v254 = vld [vmem:[#allocation8 + $0x38] sm:$0xf]
    %v255 = vld [vmem:[#allocation8 + $0x3c] sm:$0xf]
    %v256 = vld [vmem:[#allocation8 + $0x40] sm:$0xf]
    %v257 = vld [vmem:[#allocation8 + $0x44] sm:$0xf]
    %v258 = vld [vmem:[#allocation8 + $0x48] sm:$0xf]
    %v259 = vld [vmem:[#allocation8 + $0x4c] sm:$0xf]
    %v260 = vld [vmem:[#allocation8 + $0x50] sm:$0xf]
    %v261 = vld [vmem:[#allocation8 + $0x54] sm:$0xf]
    %v262 = vld [vmem:[#allocation8 + $0x58] sm:$0xf]
    %v263 = vld [vmem:[#allocation8 + $0x5c] sm:$0xf]
    %v264 = vld [vmem:[#allocation8 + $0x60] sm:$0xf]
    %v265 = vld [vmem:[#allocation8 + $0x64] sm:$0xf]
    %v266 = vld [vmem:[#allocation8 + $0x68] sm:$0xf]
    %v267 = vld [vmem:[#allocation8 + $0x6c] sm:$0xf]
    %v268 = vld [vmem:[#allocation8 + $0x70] sm:$0xf]
    %v269 = vld [vmem:[#allocation8 + $0x74] sm:$0xf]
    %v270 = vld [vmem:[#allocation8 + $0x78] sm:$0xf]
    %v271 = vld [vmem:[#allocation8 + $0x7c] sm:$0xf]
    %v272 = vld [vmem:[#allocation8 + $0x80] sm:$0xf]
    %v273 = vld [vmem:[#allocation8 + $0x84] sm:$0xf]
    %v274 = vld [vmem:[#allocation8 + $0x88] sm:$0xf]
    %v275 = vld [vmem:[#allocation8 + $0x8c] sm:$0xf]
    %v276 = vld [vmem:[#allocation8 + $0x90] sm:$0xf]
    %v277 = vld [vmem:[#allocation8 + $0x94] sm:$0xf]
    %v278 = vld [vmem:[#allocation8 + $0x98] sm:$0xf]
    %v279 = vld [vmem:[#allocation8 + $0x9c] sm:$0xf]
    %v280 = vld [vmem:[#allocation8 + $0xa0] sm:$0xf]
    %v281 = vld [vmem:[#allocation8 + $0xa4] sm:$0xf]
    %v282 = vld [vmem:[#allocation8 + $0xa8] sm:$0xf]
    %v283 = vld [vmem:[#allocation8 + $0xac] sm:$0xf]
    %v284 = vld [vmem:[#allocation8 + $0xb0] sm:$0xf]
    %v285 = vld [vmem:[#allocation8 + $0xb4] sm:$0xf]
    %v286 = vld [vmem:[#allocation8 + $0xb8] sm:$0xf]
    %v287 = vld [vmem:[#allocation8 + $0xbc] sm:$0xf]
    %v288 = vld [vmem:[%s3] sm:$0x1]
    %v290 = vlaneseq
    %v291 = vshrl.u32 %v290, 7
    %v292 = vsub.s32 0, %v291
    %v293 = vrot.slane %v288, %v292
    %v343 = vunpack.c.l.b16 %v240
    %v344 = vunpack.c.l.b16 %v241
    %v345 = vunpack.c.l.b16 %v242
    %v346 = vunpack.c.l.b16 %v243
    %v347 = vunpack.c.l.b16 %v244
    %v348 = vunpack.c.l.b16 %v245
    %v349 = vunpack.c.l.b16 %v246
    %v350 = vunpack.c.l.b16 %v247
    %v351 = vunpack.c.l.b16 %v248
    %v352 = vunpack.c.l.b16 %v249
    %v353 = vunpack.c.l.b16 %v250
    %v354 = vunpack.c.l.b16 %v251
    %v355 = vunpack.c.l.b16 %v252
    %v356 = vunpack.c.l.b16 %v253
    %v357 = vunpack.c.l.b16 %v254
    %v358 = vunpack.c.l.b16 %v255
    %v359 = vunpack.c.l.b16 %v256
    %v360 = vunpack.c.l.b16 %v257
    %v361 = vunpack.c.l.b16 %v258
    %v362 = vunpack.c.l.b16 %v259
    %v363 = vunpack.c.l.b16 %v260
    %v364 = vunpack.c.l.b16 %v261
    %v365 = vunpack.c.l.b16 %v262
    %v366 = vunpack.c.l.b16 %v263
    %v367 = vunpack.c.l.b16 %v264
    %v368 = vunpack.c.l.b16 %v265
    %v369 = vunpack.c.l.b16 %v266
    %v370 = vunpack.c.l.b16 %v267
    %v371 = vunpack.c.l.b16 %v268
    %v372 = vunpack.c.l.b16 %v269
    %v373 = vunpack.c.l.b16 %v270
    %v374 = vunpack.c.l.b16 %v271
    %v375 = vunpack.c.l.b16 %v272
    %v376 = vunpack.c.l.b16 %v273
    %v377 = vunpack.c.l.b16 %v274
    %v378 = vunpack.c.l.b16 %v275
    %v379 = vunpack.c.l.b16 %v276
    %v380 = vunpack.c.l.b16 %v277
    %v381 = vunpack.c.l.b16 %v278
    %v382 = vunpack.c.l.b16 %v279
    %v383 = vunpack.c.l.b16 %v280
    %v384 = vunpack.c.l.b16 %v281
    %v385 = vunpack.c.l.b16 %v282
    %v386 = vunpack.c.l.b16 %v283
    %v387 = vunpack.c.l.b16 %v284
    %v388 = vunpack.c.l.b16 %v285
    %v389 = vunpack.c.l.b16 %v286
    %v390 = vunpack.c.l.b16 %v287
    %v391 = vpack.c.b16 %v344, %v343
    %v392 = vpack.c.b16 %v346, %v345
    %v393 = vpack.c.b16 %v348, %v347
    %v394 = vpack.c.b16 %v350, %v349
    %v395 = vpack.c.b16 %v352, %v351
    %v396 = vpack.c.b16 %v354, %v353
    %v397 = vpack.c.b16 %v356, %v355
    %v398 = vpack.c.b16 %v358, %v357
    %v399 = vpack.c.b16 %v360, %v359
    %v400 = vpack.c.b16 %v362, %v361
    %v401 = vpack.c.b16 %v364, %v363
    %v402 = vpack.c.b16 %v366, %v365
    %v403 = vpack.c.b16 %v368, %v367
    %v404 = vpack.c.b16 %v370, %v369
    %v405 = vpack.c.b16 %v372, %v371
    %v406 = vpack.c.b16 %v374, %v373
    %v407 = vpack.c.b16 %v376, %v375
    %v408 = vpack.c.b16 %v378, %v377
    %v409 = vpack.c.b16 %v380, %v379
    %v410 = vpack.c.b16 %v382, %v381
    %v411 = vpack.c.b16 %v384, %v383
    %v412 = vpack.c.b16 %v386, %v385
    %v413 = vpack.c.b16 %v388, %v387
    %v414 = vpack.c.b16 %v390, %v389
    %439 = vmatprep.subr.bf16.mxu0 0
    %440 = vmatpush1.bf16.msra.mxu0 %v391
    %441 = vmatprep.subr.bf16.mxu0 0
    %442 = vmatpush1.bf16.msra.mxu0 %v392
    %443 = vmatprep.subr.bf16.mxu0 0
    %444 = vmatpush1.bf16.msra.mxu0 %v393
    %445 = vmatprep.subr.bf16.mxu0 0
    %446 = vmatpush1.bf16.msra.mxu0 %v394
    %447 = vmatprep.subr.bf16.mxu0 0
    %448 = vmatpush1.bf16.msra.mxu0 %v395
    %449 = vmatprep.subr.bf16.mxu0 0
    %450 = vmatpush1.bf16.msra.mxu0 %v396
    %451 = vmatprep.subr.bf16.mxu0 0
    %452 = vmatpush1.bf16.msra.mxu0 %v397
    %453 = vmatprep.subr.bf16.mxu0 0
    %454 = vmatpush1.bf16.msra.mxu0 %v398
    %455 = vmatprep.subr.bf16.mxu0 0
    %456 = vmatpush1.bf16.msra.mxu0 %v399
    %457 = vmatprep.subr.bf16.mxu0 0
    %458 = vmatpush1.bf16.msra.mxu0 %v400
    %459 = vmatprep.subr.bf16.mxu0 0
    %460 = vmatpush1.bf16.msra.mxu0 %v401
    %461 = vmatprep.subr.bf16.mxu0 0
    %462 = vmatpush1.bf16.msra.mxu0 %v402
    %463 = vmatprep.subr.bf16.mxu0 0
    %464 = vmatpush1.bf16.msra.mxu0 %v403
    %465 = vmatprep.subr.bf16.mxu0 0
    %466 = vmatpush1.bf16.msra.mxu0 %v404
    %467 = vmatprep.subr.bf16.mxu0 0
    %468 = vmatpush1.bf16.msra.mxu0 %v405
    %469 = vmatprep.subr.bf16.mxu0 0
    %470 = vmatpush1.bf16.msra.mxu0 %v406
    %471 = vmatprep.mubr.bf16.mxu0 %v175
    %472 = vmatmul.mubr.bf16.gmra.mrb[0].mxu0 %v158
    %v473 = vpop.f32.mrb[0].mxu0
    %v474 = vadd.f32 %v293, %v473
    %v475 = vpop.f32.mrb[0].mxu0
    %v476 = vpop.f32.mrb[0].mxu0
    %v477 = vadd.f32 %v293, %v476
    %v478 = vpop.f32.mrb[0].mxu0
    %479 = vmatprep.mubr.bf16.mxu0 %v216
    %480 = vmatmul.mubr.bf16.gmra.mrb[0].mxu0 %v199
    %v481 = vpop.f32.mrb[0].mxu0
    %v482 = vadd.f32 %v293, %v481
    %v483 = vpop.f32.mrb[0].mxu0
    %v484 = vpop.f32.mrb[0].mxu0
    %v485 = vadd.f32 %v293, %v484
    %v486 = vpop.f32.mrb[0].mxu0
    %487 = vdwg.mxu0
    %488 = vmatprep.subr.bf16.mxu0 0
    %489 = vmatpush1.bf16.msra.mxu0 %v407
    %490 = vmatprep.subr.bf16.mxu0 0
    %491 = vmatpush1.bf16.msra.mxu0 %v408
    %492 = vmatprep.subr.bf16.mxu0 0
    %493 = vmatpush1.bf16.msra.mxu0 %v409
    %494 = vmatprep.subr.bf16.mxu0 0
    %495 = vmatpush1.bf16.msra.mxu0 %v410
    %496 = vmatprep.subr.bf16.mxu0 0
    %497 = vmatpush1.bf16.msra.mxu0 %v411
    %498 = vmatprep.subr.bf16.mxu0 0
    %499 = vmatpush1.bf16.msra.mxu0 %v412
    %500 = vmatprep.subr.bf16.mxu0 0
    %501 = vmatpush1.bf16.msra.mxu0 %v413
    %502 = vmatprep.subr.bf16.mxu0 0
    %503 = vmatpush1.bf16.msra.mxu0 %v414
    %504 = vmatprep.subr.bf16.mxu0 0
    %505 = vmatpush1.bf16.msra.mxu0 0
    %506 = vmatprep.subr.bf16.mxu0 0
    %507 = vmatpush1.bf16.msra.mxu0 0
    %508 = vmatprep.subr.bf16.mxu0 0
    %509 = vmatpush1.bf16.msra.mxu0 0
    %510 = vmatprep.subr.bf16.mxu0 0
    %511 = vmatpush1.bf16.msra.mxu0 0
    %512 = vmatprep.subr.bf16.mxu0 0
    %513 = vmatpush1.bf16.msra.mxu0 0
    %514 = vmatprep.subr.bf16.mxu0 0
    %515 = vmatpush1.bf16.msra.mxu0 0
    %516 = vmatprep.subr.bf16.mxu0 0
    %517 = vmatpush1.bf16.msra.mxu0 0
    %518 = vmatprep.subr.bf16.mxu0 0
    %519 = vmatpush1.bf16.msra.mxu0 0
    %520 = vmatprep.mubr.bf16.mxu0 0
    %521 = vmatmul.mubr.bf16.gmra.mrb[0].mxu0 %v192
    %v522 = vpop.f32.mrb[0].mxu0
    %v523 = vadd.f32 %v474, %v522
    %v524 = vpop.f32.mrb[0].mxu0
    %v525 = vpop.f32.mrb[0].mxu0
    %v526 = vadd.f32 %v477, %v525
    %v527 = vpop.f32.mrb[0].mxu0
    %528 = vmatprep.mubr.bf16.mxu0 0
    %529 = vmatmul.mubr.bf16.gmra.mrb[0].mxu0 %v233
    %v530 = vpop.f32.mrb[0].mxu0
    %v531 = vadd.f32 %v482, %v530
    %v532 = vpop.f32.mrb[0].mxu0
    %v533 = vpop.f32.mrb[0].mxu0
    %v534 = vadd.f32 %v485, %v533
    %v535 = vpop.f32.mrb[0].mxu0
    %536 = vdwg.mxu0
    %v537 = vxor.u32 %v523, 2147483648
    %v538 = vxor.u32 %v526, 2147483648
    %v539 = vxor.u32 %v531, 2147483648
    %v540 = vxor.u32 %v534, 2147483648
    %v541 = vmul.f32 %v537, 1.442695
    %v542 = vpow.pop %v541
    %v543 = vmul.f32 %v538, 1.442695
    %v544 = vpow.pop %v543
    %v545 = vmul.f32 %v539, 1.442695
    %v546 = vpow.pop %v545
    %v547 = vmul.f32 %v540, 1.442695
    %v548 = vpow.pop %v547
    %v549 = vadd.f32 %v542, 1.0
    %v550 = vadd.f32 %v544, 1.0
    %v551 = vadd.f32 %v546, 1.0
    %v552 = vadd.f32 %v548, 1.0
    %v553 = vrcp.pop %v549
    %v554 = vmul.f32 1.0, %v553
    %v555 = vrcp.pop %v550
    %v556 = vmul.f32 1.0, %v555
    %v557 = vrcp.pop %v551
    %v558 = vmul.f32 1.0, %v557
    %v559 = vrcp.pop %v552
    %v560 = vmul.f32 1.0, %v559
    %v561 = vmul.f32 %v523, %v554
    %v562 = vmul.f32 %v526, %v556
    %v563 = vmul.f32 %v531, %v558
    %v564 = vmul.f32 %v534, %v560
    %v565 = vpack.c.bf16 %v562, %v561
    %v566 = vpack.c.bf16 %v564, %v563
    %v567 = vld [vmem:[#allocation9] sm:$0xf]
    %v568 = vld [vmem:[#allocation9 + $0x4] sm:$0xf]
    %v569 = vld [vmem:[#allocation9 + $0x8] sm:$0xf]
    %v570 = vld [vmem:[#allocation9 + $0xc] sm:$0xf]
    %v571 = vld [vmem:[#allocation9 + $0x10] sm:$0xf]
    %v572 = vld [vmem:[#allocation9 + $0x14] sm:$0xf]
    %v573 = vld [vmem:[#allocation9 + $0x18] sm:$0xf]
    %v574 = vld [vmem:[#allocation9 + $0x1c] sm:$0xf]
    %v575 = vld [vmem:[#allocation9 + $0x20] sm:$0xf]
    %v576 = vld [vmem:[#allocation9 + $0x24] sm:$0xf]
    %v577 = vld [vmem:[#allocation9 + $0x28] sm:$0xf]
    %v578 = vld [vmem:[#allocation9 + $0x2c] sm:$0xf]
    %v579 = vld [vmem:[#allocation9 + $0x30] sm:$0xf]
    %v580 = vld [vmem:[#allocation9 + $0x34] sm:$0xf]
    %v581 = vld [vmem:[#allocation9 + $0x38] sm:$0xf]
    %v582 = vld [vmem:[#allocation9 + $0x3c] sm:$0xf]
    %v599 = vunpack.c.l.b16 %v567
    %v600 = vunpack.c.l.b16 %v568
    %v601 = vunpack.c.l.b16 %v569
    %v602 = vunpack.c.l.b16 %v570
    %v603 = vunpack.c.l.b16 %v571
    %v604 = vunpack.c.l.b16 %v572
    %v605 = vunpack.c.l.b16 %v573
    %v606 = vunpack.c.l.b16 %v574
    %v607 = vunpack.c.l.b16 %v575
    %v608 = vunpack.c.l.b16 %v576
    %v609 = vunpack.c.l.b16 %v577
    %v610 = vunpack.c.l.b16 %v578
    %v611 = vunpack.c.l.b16 %v579
    %v612 = vunpack.c.l.b16 %v580
    %v613 = vunpack.c.l.b16 %v581
    %v614 = vunpack.c.l.b16 %v582
    %v615 = vpack.c.b16 %v600, %v599
    %v616 = vpack.c.b16 %v602, %v601
    %v617 = vpack.c.b16 %v604, %v603
    %v618 = vpack.c.b16 %v606, %v605
    %v619 = vpack.c.b16 %v608, %v607
    %v620 = vpack.c.b16 %v610, %v609
    %v621 = vpack.c.b16 %v612, %v611
    %v622 = vpack.c.b16 %v614, %v613
    %631 = vmatprep.subr.bf16.mxu0 0
    %632 = vmatpush1.bf16.msra.mxu0 %v615
    %633 = vmatprep.subr.bf16.mxu0 0
    %634 = vmatpush1.bf16.msra.mxu0 %v616
    %635 = vmatprep.subr.bf16.mxu0 0
    %636 = vmatpush1.bf16.msra.mxu0 %v617
    %637 = vmatprep.subr.bf16.mxu0 0
    %638 = vmatpush1.bf16.msra.mxu0 %v618
    %639 = vmatprep.subr.bf16.mxu0 0
    %640 = vmatpush1.bf16.msra.mxu0 %v619
    %641 = vmatprep.subr.bf16.mxu0 0
    %642 = vmatpush1.bf16.msra.mxu0 %v620
    %643 = vmatprep.subr.bf16.mxu0 0
    %644 = vmatpush1.bf16.msra.mxu0 %v621
    %645 = vmatprep.subr.bf16.mxu0 0
    %646 = vmatpush1.bf16.msra.mxu0 %v622
    %647 = vmatprep.subr.bf16.mxu0 0
    %648 = vmatpush1.bf16.msra.mxu0 0
    %649 = vmatprep.subr.bf16.mxu0 0
    %650 = vmatpush1.bf16.msra.mxu0 0
    %651 = vmatprep.subr.bf16.mxu0 0
    %652 = vmatpush1.bf16.msra.mxu0 0
    %653 = vmatprep.subr.bf16.mxu0 0
    %654 = vmatpush1.bf16.msra.mxu0 0
    %655 = vmatprep.subr.bf16.mxu0 0
    %656 = vmatpush1.bf16.msra.mxu0 0
    %657 = vmatprep.subr.bf16.mxu0 0
    %658 = vmatpush1.bf16.msra.mxu0 0
    %659 = vmatprep.subr.bf16.mxu0 0
    %660 = vmatpush1.bf16.msra.mxu0 0
    %661 = vmatprep.subr.bf16.mxu0 0
    %662 = vmatpush1.bf16.msra.mxu0 0
    %663 = vmatprep.mubr.bf16.mxu0 0
    %664 = vmatmul.mubr.bf16.gmra.mrb[0].mxu0 %v565
    %v665 = vpop.f32.mrb[0].mxu0
    %v666 = vadd.f32 0.0, %v665
    %v667 = vpop.f32.mrb[0].mxu0
    %v668 = vpop.f32.mrb[0].mxu0
    %v669 = vadd.f32 0.0, %v668
    %v670 = vpop.f32.mrb[0].mxu0
    %671 = vmatprep.mubr.bf16.mxu0 0
    %672 = vmatmul.mubr.bf16.gmra.mrb[0].mxu0 %v566
    %v673 = vpop.f32.mrb[0].mxu0
    %v674 = vadd.f32 0.0, %v673
    %v675 = vpop.f32.mrb[0].mxu0
    %v676 = vpop.f32.mrb[0].mxu0
    %v677 = vadd.f32 0.0, %v676
    %v678 = vpop.f32.mrb[0].mxu0
    %679 = vdwg.mxu0
    %v680 = vmul.f32 %v666, 0.088388346
    %v681 = vmul.f32 %v669, 0.088388346
    %v682 = vmul.f32 %v674, 0.088388346
    %v683 = vmul.f32 %v677, 0.088388346
    %v684 = vmax.f32 %v680, %v681
    %v685 = vrot.slane %v684, 4
    %v686 = vmax.f32 %v684, %v685
    %v687 = vrot.slane %v686, 2
    %v688 = vmax.f32 %v686, %v687
    %v689 = vrot.slane %v688, 1
    %v690 = vmax.f32 %v688, %v689
    %v691 = vmax.f32 %v682, %v683
    %v692 = vrot.slane %v691, 4
    %v693 = vmax.f32 %v691, %v692
    %v694 = vrot.slane %v693, 2
    %v695 = vmax.f32 %v693, %v694
    %v696 = vrot.slane %v695, 1
    %v697 = vmax.f32 %v695, %v696
    %v698 = vsub.f32 %v680, %v690
    %v699 = vsub.f32 %v681, %v690
    %v700 = vsub.f32 %v682, %v697
    %v701 = vsub.f32 %v683, %v697
    %v702 = vmul.f32 %v698, 1.442695
    %v703 = vpow.pop %v702
    %v704 = vmul.f32 %v699, 1.442695
    %v705 = vpow.pop %v704
    %v706 = vmul.f32 %v700, 1.442695
    %v707 = vpow.pop %v706
    %v708 = vmul.f32 %v701, 1.442695
    %v709 = vpow.pop %v708
    %v710 = vld [vmem:[#allocation3] sm:$0xff]
    %v711 = vld [vmem:[#allocation3 + $0x8] sm:$0xff]
    %v712 = vld [vmem:[#allocation3 + $0x10] sm:$0xff]
    %v713 = vld [vmem:[#allocation3 + $0x18] sm:$0xff]
    %v714 = vmul.f32 %v710, %v703
    %v715 = vmul.f32 %v711, %v705
    %v716 = vmul.f32 %v712, %v707
    %v717 = vmul.f32 %v713, %v709
    %v718 = vadd.f32 %v714, %v715
    %v719 = vrot.slane %v718, 4
    %v720 = vadd.f32 %v718, %v719
    %v721 = vrot.slane %v720, 2
    %v722 = vadd.f32 %v720, %v721
    %v723 = vrot.slane %v722, 1
    %v724 = vadd.f32 %v722, %v723
    %v725 = vadd.f32 %v716, %v717
    %v726 = vrot.slane %v725, 4
    %v727 = vadd.f32 %v725, %v726
    %v728 = vrot.slane %v727, 2
    %v729 = vadd.f32 %v727, %v728
    %v730 = vrot.slane %v729, 1
    %v731 = vadd.f32 %v729, %v730
    %v732 = vadd.f32 %v703, %v705
    %v733 = vrot.slane %v732, 4
    %v734 = vadd.f32 %v732, %v733
    %v735 = vrot.slane %v734, 2
    %v736 = vadd.f32 %v734, %v735
    %v737 = vrot.slane %v736, 1
    %v738 = vadd.f32 %v736, %v737
    %v739 = vadd.f32 %v707, %v709
    %v740 = vrot.slane %v739, 4
    %v741 = vadd.f32 %v739, %v740
    %v742 = vrot.slane %v741, 2
    %v743 = vadd.f32 %v741, %v742
    %v744 = vrot.slane %v743, 1
    %v745 = vadd.f32 %v743, %v744
    %v746 = vrcp.pop %v738
    %v747 = vrcp.pop %v745
    %v748 = vmul.f32 %v724, %v746
    %v749 = vmul.f32 %v731, %v747
    %750 = vst [vmem:[#allocation11] sm:$0x1] %v748
    %751 = vst [vmem:[#allocation11 + $0x1] sm:$0x1] %v749
    // Predicated region
    $region38: #{tpu_custom_call.1} parent=1 // pred_check
      _
    $region39: #{tpu_custom_call.1} parent=1 // pred_check_branch
      %753 = sbr.rel (0) target = $region41
    $region40: #{tpu_custom_call.1} parent=1 // pred_region
      %s755 = ssub.s32 32, 32
      %756 = vsyncadd [#allocation5], %s755
      %s757 = sshll.u32 [#allocation11], 4
      %s758 = int_to_ptr.vmem [resolvable:$true] %s757
      %763 = dma.vmem_to_hbm [thread:$0]  %s758, 32, %s5, [#allocation5], 16, 16, 1
    $region41: #{tpu_custom_call.1} parent=1 // pred_fallthru
      _
    // Predicated region
    $region42: #{tpu_custom_call.1} parent=1 // pred_check
      _
    $region43: #{tpu_custom_call.1} parent=1 // pred_check_branch
      %765 = sbr.rel (0) target = $region45
    $region44: #{tpu_custom_call.1} parent=1 // pred_region
      %766 = dma.done [#allocation5], 32
    $region45: #{tpu_custom_call.1} parent=1 // pred_fallthru
      _
    %767 = vsyncpa [#allocation4], 1
    %768 = vsyncpa [#allocation7], 1
    %769 = vsyncpa [#allocation10], 1
    %770 = vsyncpa [#allocation5], 1

</llo_original>
